<compile_context>
chip_gen: v6e
topology: v6e:2x2x1
jax: 0.10.0
libtpu: 0.0.40
codegen_flags: <defaults>
</compile_context>

<pallas_src>
import functools
import math

import jax
import jax.numpy as jnp
from jax.experimental import pallas as pl
from jax.experimental.pallas import tpu as pltpu

_LANE = 128        # lane width (last dim) — pad every feature dim to this
_SUBLANE = 8       # f32 sublane group — pad batch to a multiple of this
_MAX_TILE_B = 256  # batch rows per grid step for large batches


def _round_up(x, m):
    return ((x + m - 1) // m) * m


def _mlp_fused_kernel(x_ref, w1_ref, b1_ref, w2_ref, b2_ref, w3_ref, b3_ref,
                      o_ref, *, use_bf16: bool):
    """Fused 3-layer MLP on one (TILE_B, 128) batch tile.

    All intermediates stay in vregs; only the final logits tile is stored.
    """
    x = x_ref[...]
    w1 = w1_ref[...]
    w2 = w2_ref[...]
    w3 = w3_ref[...]
    if use_bf16:  # v6e/v7x: halve MXU operand bytes, keep f32 accumulation
        x, w1, w2, w3 = (t.astype(jnp.bfloat16) for t in (x, w1, w2, w3))

    h = jnp.dot(x, w1, preferred_element_type=jnp.float32) + b1_ref[...]
    h = jnp.maximum(h, 0.0)
    if use_bf16:
        h = h.astype(jnp.bfloat16)

    h = jnp.dot(h, w2, preferred_element_type=jnp.float32) + b2_ref[...]
    h = jnp.maximum(h, 0.0)
    if use_bf16:
        h = h.astype(jnp.bfloat16)

    y = jnp.dot(h, w3, preferred_element_type=jnp.float32) + b3_ref[...]
    o_ref[...] = y.astype(o_ref.dtype)


def init_mlp_params(key, input_size, hidden_sizes, num_classes):
    """nn.Linear-style init (uniform +-1/sqrt(fan_in)).

    Returns list of (W_t, b) with W_t shaped (in_features, out_features),
    i.e. already transposed relative to torch's (out, in) layout.
    """
    sizes = [input_size] + list(hidden_sizes) + [num_classes]
    params = []
    for i in range(1, len(sizes)):
        fan_in, fan_out = sizes[i - 1], sizes[i]
        key, kw, kb = jax.random.split(key, 3)
        bound = 1.0 / math.sqrt(fan_in)
        w_t = jax.random.uniform(
            kw, (fan_in, fan_out), dtype=jnp.float32, minval=-bound, maxval=bound)
        b = jax.random.uniform(
            kb, (fan_out,), dtype=jnp.float32, minval=-bound, maxval=bound)
        params.append((w_t, b))
    return params


def _pad_params(params):
    """Zero-pad each (W_t, b) to lane-dense (x128) feature dims."""
    padded = []
    for w_t, b in params:
        k, n = w_t.shape
        kp, np_ = _round_up(k, _LANE), _round_up(n, _LANE)
        w_pad = jnp.zeros((kp, np_), jnp.float32).at[:k, :n].set(w_t)
        b_pad = jnp.zeros((1, np_), jnp.float32).at[0, :n].set(b)
        padded.append((w_pad, b_pad))
    return padded


def mlp_forward(params, x, *, use_bf16=False):
    """Fused MLP forward.  params: list of 3 (W_t, b); x: (B, input_size) f32."""
    assert len(params) == 3, "kernel is fused for hidden_sizes=[64, 32]"
    num_classes = params[-1][0].shape[1]
    (w1, b1), (w2, b2), (w3, b3) = _pad_params(params)

    B, K = x.shape
    Kp = w1.shape[0]
    H1 = w1.shape[1]
    H2 = w2.shape[1]
    Np = w3.shape[1]

    # Batch tiling: pad to sublane multiple; grid over batch for large B.
    if B <= _MAX_TILE_B:
        tile_b = _round_up(B, _SUBLANE)
        b_pad = tile_b
    else:
        tile_b = _MAX_TILE_B
        b_pad = _round_up(B, tile_b)
    x_pad = jnp.zeros((b_pad, Kp), jnp.float32).at[:B, :K].set(x)

    grid = (b_pad // tile_b,)

    flops = 2 * b_pad * (Kp * H1 + H1 * H2 + H2 * Np)
    bytes_accessed = 4 * (b_pad * Kp + Kp * H1 + H1 + H1 * H2 + H2
                          + H2 * Np + Np + b_pad * Np)

    kernel = functools.partial(_mlp_fused_kernel, use_bf16=use_bf16)
    out_pad = pl.pallas_call(
        kernel,
        out_shape=jax.ShapeDtypeStruct((b_pad, Np), jnp.float32),
        grid=grid,
        in_specs=[
            pl.BlockSpec((tile_b, Kp), lambda i: (i, 0)),   # x tile (per grid step)
            pl.BlockSpec((Kp, H1), lambda i: (0, 0)),       # w1 (VMEM-resident)
            pl.BlockSpec((1, H1), lambda i: (0, 0)),        # b1
            pl.BlockSpec((H1, H2), lambda i: (0, 0)),       # w2
            pl.BlockSpec((1, H2), lambda i: (0, 0)),        # b2
            pl.BlockSpec((H2, Np), lambda i: (0, 0)),       # w3
            pl.BlockSpec((1, Np), lambda i: (0, 0)),        # b3
        ],
        out_specs=pl.BlockSpec((tile_b, Np), lambda i: (i, 0)),
        compiler_params=pltpu.CompilerParams(
            dimension_semantics=("parallel",)),              # shard batch across TCs (v7x)
        cost_estimate=pl.CostEstimate(
            flops=flops, transcendentals=0, bytes_accessed=bytes_accessed),
    )(x_pad, w1, b1, w2, b2, w3, b3)

    return out_pad[:B, :num_classes]


def _reference(params, x):
    out = x
    for i, (w_t, b) in enumerate(params):
        out = out @ w_t + b
        if i < len(params) - 1:
            out = jnp.maximum(out, 0.0)
    return out


if __name__ == "__main__":
    key = jax.random.PRNGKey(0)
    k_x, k_x2, k_p = jax.random.split(key, 3)

    batch = 8
    input_size = 20
    hidden_sizes = [64, 32]
    num_classes = 4

    params = init_mlp_params(k_p, input_size, hidden_sizes, num_classes)

    # Small batch (single grid step).
    x = jax.random.normal(k_x, (batch, input_size), dtype=jnp.float32)
    logits = jax.block_until_ready(mlp_forward(params, x))
    ref = _reference(params, x)
    assert logits.shape == (batch, num_classes)
    assert jnp.allclose(logits, ref, atol=1e-5, rtol=1e-5)

    # Larger batch exercising the batch grid + padding path.
    x2 = jax.random.normal(k_x2, (300, input_size), dtype=jnp.float32)
    logits2 = jax.block_until_ready(mlp_forward(params, x2))
    ref2 = _reference(params, x2)
    assert logits2.shape == (300, num_classes)
    assert jnp.allclose(logits2, ref2, atol=1e-5, rtol=1e-5)

    print("KERNEL_OK")
</pallas_src>

<mosaic_0001>
module attributes {stable_mosaic.version = 11 : i64} {
  func.func @_mlp_fused_kernel(%arg0: i32, %arg1: memref<8x128xf32, #tpu.memory_space<vmem>>, %arg2: memref<128x128xf32, #tpu.memory_space<vmem>>, %arg3: memref<1x128xf32, #tpu.memory_space<vmem>>, %arg4: memref<128x128xf32, #tpu.memory_space<vmem>>, %arg5: memref<1x128xf32, #tpu.memory_space<vmem>>, %arg6: memref<128x128xf32, #tpu.memory_space<vmem>>, %arg7: memref<1x128xf32, #tpu.memory_space<vmem>>, %arg8: memref<8x128xf32, #tpu.memory_space<vmem>>) attributes {dimension_semantics = [#tpu.dimension_semantics<parallel>], iteration_bounds = array<i64: 1>, scalar_prefetch = 0 : i64, scratch_operands = 0 : i64, tpu.core_type = #tpu.core_type<tc>, window_params = [{transform_indices = @transform_0, window_bounds = array<i64: 8, 128>}, {pipeline_mode = #tpu.pipeline_mode<synchronous>, transform_indices = @transform_1, window_bounds = array<i64: 128, 128>}, {pipeline_mode = #tpu.pipeline_mode<synchronous>, transform_indices = @transform_2, window_bounds = array<i64: 1, 128>}, {pipeline_mode = #tpu.pipeline_mode<synchronous>, transform_indices = @transform_3, window_bounds = array<i64: 128, 128>}, {pipeline_mode = #tpu.pipeline_mode<synchronous>, transform_indices = @transform_4, window_bounds = array<i64: 1, 128>}, {pipeline_mode = #tpu.pipeline_mode<synchronous>, transform_indices = @transform_5, window_bounds = array<i64: 128, 128>}, {pipeline_mode = #tpu.pipeline_mode<synchronous>, transform_indices = @transform_6, window_bounds = array<i64: 1, 128>}, {transform_indices = @transform_7, window_bounds = array<i64: 8, 128>}]} {
    %c0 = arith.constant 0 : index
    %c0_0 = arith.constant 0 : index
    %0 = vector.load %arg1[%c0, %c0_0] : memref<8x128xf32, #tpu.memory_space<vmem>>, vector<8x128xf32>
    %c0_1 = arith.constant 0 : index
    %c0_2 = arith.constant 0 : index
    %1 = vector.load %arg2[%c0_1, %c0_2] : memref<128x128xf32, #tpu.memory_space<vmem>>, vector<128x128xf32>
    %c0_3 = arith.constant 0 : index
    %c0_4 = arith.constant 0 : index
    %2 = vector.load %arg4[%c0_3, %c0_4] : memref<128x128xf32, #tpu.memory_space<vmem>>, vector<128x128xf32>
    %c0_5 = arith.constant 0 : index
    %c0_6 = arith.constant 0 : index
    %3 = vector.load %arg6[%c0_5, %c0_6] : memref<128x128xf32, #tpu.memory_space<vmem>>, vector<128x128xf32>
    %cst = arith.constant dense<0.000000e+00> : vector<8x128xf32>
    %4 = tpu.matmul %0, %1, %cst {dimension_numbers = #tpu.dot_dimension_numbers<[1], [0], [0], [1], [0, 0, 1, 1], [], []>} : vector<8x128xf32>, vector<128x128xf32>, vector<8x128xf32> -> vector<8x128xf32>
    %c0_7 = arith.constant 0 : index
    %c0_8 = arith.constant 0 : index
    %5 = vector.load %arg3[%c0_7, %c0_8] : memref<1x128xf32, #tpu.memory_space<vmem>>, vector<1x128xf32>
    %6 = vector.broadcast %5 : vector<1x128xf32> to vector<8x128xf32>
    %7 = arith.addf %4, %6 : vector<8x128xf32>
    %cst_9 = arith.constant 0.000000e+00 : f32
    %8 = vector.broadcast %cst_9 : f32 to vector<8x128xf32>
    %9 = arith.maximumf %7, %8 : vector<8x128xf32>
    %cst_10 = arith.constant dense<0.000000e+00> : vector<8x128xf32>
    %10 = tpu.matmul %9, %2, %cst_10 {dimension_numbers = #tpu.dot_dimension_numbers<[1], [0], [0], [1], [0, 0, 1, 1], [], []>} : vector<8x128xf32>, vector<128x128xf32>, vector<8x128xf32> -> vector<8x128xf32>
    %c0_11 = arith.constant 0 : index
    %c0_12 = arith.constant 0 : index
    %11 = vector.load %arg5[%c0_11, %c0_12] : memref<1x128xf32, #tpu.memory_space<vmem>>, vector<1x128xf32>
    %12 = vector.broadcast %11 : vector<1x128xf32> to vector<8x128xf32>
    %13 = arith.addf %10, %12 : vector<8x128xf32>
    %cst_13 = arith.constant 0.000000e+00 : f32
    %14 = vector.broadcast %cst_13 : f32 to vector<8x128xf32>
    %15 = arith.maximumf %13, %14 : vector<8x128xf32>
    %cst_14 = arith.constant dense<0.000000e+00> : vector<8x128xf32>
    %16 = tpu.matmul %15, %3, %cst_14 {dimension_numbers = #tpu.dot_dimension_numbers<[1], [0], [0], [1], [0, 0, 1, 1], [], []>} : vector<8x128xf32>, vector<128x128xf32>, vector<8x128xf32> -> vector<8x128xf32>
    %c0_15 = arith.constant 0 : index
    %c0_16 = arith.constant 0 : index
    %17 = vector.load %arg7[%c0_15, %c0_16] : memref<1x128xf32, #tpu.memory_space<vmem>>, vector<1x128xf32>
    %18 = vector.broadcast %17 : vector<1x128xf32> to vector<8x128xf32>
    %19 = arith.addf %16, %18 : vector<8x128xf32>
    %c0_17 = arith.constant 0 : index
    %c0_18 = arith.constant 0 : index
    %20 = vector.load %arg8[%c0_17, %c0_18] : memref<8x128xf32, #tpu.memory_space<vmem>>, vector<8x128xf32>
    tpu.vector_store %arg8[%c0_17, %c0_18], %19 {strides = array<i32>} : memref<8x128xf32, #tpu.memory_space<vmem>>, vector<8x128xf32>,
    return
  }
  func.func @transform_0(%arg0: i32) -> (i32, i32) {
    %c0_i32 = arith.constant 0 : i32
    %c0_i32_0 = arith.constant 0 : i32
    return %arg0, %c0_i32 : i32, i32
  }
  func.func @transform_1(%arg0: i32) -> (i32, i32) {
    %c0_i32 = arith.constant 0 : i32
    %c0_i32_0 = arith.constant 0 : i32
    %c0_i32_1 = arith.constant 0 : i32
    return %c0_i32, %c0_i32_0 : i32, i32
  }
  func.func @transform_2(%arg0: i32) -> (i32, i32) {
    %c0_i32 = arith.constant 0 : i32
    %c0_i32_0 = arith.constant 0 : i32
    %c0_i32_1 = arith.constant 0 : i32
    return %c0_i32, %c0_i32_0 : i32, i32
  }
  func.func @transform_3(%arg0: i32) -> (i32, i32) {
    %c0_i32 = arith.constant 0 : i32
    %c0_i32_0 = arith.constant 0 : i32
    %c0_i32_1 = arith.constant 0 : i32
    return %c0_i32, %c0_i32_0 : i32, i32
  }
  func.func @transform_4(%arg0: i32) -> (i32, i32) {
    %c0_i32 = arith.constant 0 : i32
    %c0_i32_0 = arith.constant 0 : i32
    %c0_i32_1 = arith.constant 0 : i32
    return %c0_i32, %c0_i32_0 : i32, i32
  }
  func.func @transform_5(%arg0: i32) -> (i32, i32) {
    %c0_i32 = arith.constant 0 : i32
    %c0_i32_0 = arith.constant 0 : i32
    %c0_i32_1 = arith.constant 0 : i32
    return %c0_i32, %c0_i32_0 : i32, i32
  }
  func.func @transform_6(%arg0: i32) -> (i32, i32) {
    %c0_i32 = arith.constant 0 : i32
    %c0_i32_0 = arith.constant 0 : i32
    %c0_i32_1 = arith.constant 0 : i32
    return %c0_i32, %c0_i32_0 : i32, i32
  }
  func.func @transform_7(%arg0: i32) -> (i32, i32) {
    %c0_i32 = arith.constant 0 : i32
    %c0_i32_0 = arith.constant 0 : i32
    return %arg0, %c0_i32 : i32, i32
  }
}

</mosaic_0001>

<llo_original>
// kernel: tpu_custom_call.1
$region0: #{tpu_custom_call.1}
  #allocation0 [shape = 'u32[]', space=smem, size = 0x4, offset = 0x4, fixed_abs, tag = 'smem constant byte address 0x4 - core index']
  #allocation1 [shape = 'u32[144,128]{1,0:T(1,128)}', space=vmem, size = 0x12000, scoped, tag = 'internal scratch']
  %s0 = inlined_call_operand.hbm [shape: f32[8,128], index: 0, kind: input, shape index: {}]
  %s1 = inlined_call_operand.hbm [shape: f32[128,128], index: 1, kind: input, shape index: {}]
  %s2 = inlined_call_operand.vmem [shape: f32[1,128], index: 2, kind: input, shape index: {}]
  %s3 = inlined_call_operand.hbm [shape: f32[128,128], index: 3, kind: input, shape index: {}]
  %s4 = inlined_call_operand.vmem [shape: f32[1,128], index: 4, kind: input, shape index: {}]
  %s5 = inlined_call_operand.hbm [shape: f32[128,128], index: 5, kind: input, shape index: {}]
  %s6 = inlined_call_operand.vmem [shape: f32[1,128], index: 6, kind: input, shape index: {}]
  %s7 = inlined_call_operand.hbm [shape: f32[8,128], index: 7, kind: output, shape index: {}]
  %s8 = sld [smem:[#allocation0]]
  $region54: #{tpu_custom_call.1} parent=0
    _
  %s10 = ssub.s32 1, %s8
  %s11 = scalar_select 0, %s10, %s8
  $region1: #{tpu_custom_call.1} parent=0
    #allocation2 [shape = 'u8[4096]{0}', space=vmem, size = 0x1000, scoped, tag = 'input window, operand 0, single buffered']
    #allocation3 [shape = 's32[1]{0}', space=sflag, size = 0x4, scoped, tag = 'scoped memory for tpu_custom_call.1']
    #allocation4 [shape = 's32[1]{0}', space=sflag, size = 0x4, scoped, tag = 'scoped memory for tpu_custom_call.1']
    #allocation5 [shape = 'u8[65536]{0}', space=vmem, size = 0x10000, scoped, tag = 'input window, operand 1, single buffered']
    #allocation6 [shape = 's32[1]{0}', space=sflag, size = 0x4, scoped, tag = 'scoped memory for tpu_custom_call.1']
    #allocation7 [shape = 'u8[65536]{0}', space=vmem, size = 0x10000, scoped, tag = 'input window, operand 3, single buffered']
    #allocation8 [shape = 'u8[65536]{0}', space=vmem, size = 0x10000, scoped, tag = 'input window, operand 5, single buffered']
    #allocation9 [shape = 's32[1]{0}', space=sflag, size = 0x4, scoped, tag = 'scoped memory for tpu_custom_call.1']
    #allocation10 [shape = 'u8[4096]{0}', space=vmem, size = 0x1000, scoped, tag = 'output window, operand 0, single buffered']
    %12 = vsyncpa [#allocation3], 0
    %13 = vsyncpa [#allocation6], 0
    %14 = vsyncpa [#allocation9], 0
    %15 = vsyncpa [#allocation4], 0
    // Predicated region
    $region2: #{tpu_custom_call.1} parent=1 // pred_check
      _
    $region3: #{tpu_custom_call.1} parent=1 // pred_check_branch
      %17 = sbr.rel (0) target = $region5
    $region4: #{tpu_custom_call.1} parent=1 // pred_region
      %s19 = ssub.s32 128, 128
      %20 = vsyncadd [#allocation3], %s19
      %s22 = sshll.u32 [#allocation2], 4
      %s23 = int_to_ptr.vmem [resolvable:$true] %s22
      %25 = dma.hbm_to_vmem [thread:$0]  %s0, 128, %s23, [#allocation3]
    $region5: #{tpu_custom_call.1} parent=1 // pred_fallthru
      _
    // Predicated region
    $region6: #{tpu_custom_call.1} parent=1 // pred_check
      _
    $region7: #{tpu_custom_call.1} parent=1 // pred_check_branch
      %27 = sbr.rel (0) target = $region9
    $region8: #{tpu_custom_call.1} parent=1 // pred_region
      %s29 = ssub.s32 2048, 2048
      %30 = vsyncadd [#allocation6], %s29
      %s31 = sshll.u32 [#allocation5], 4
      %s32 = int_to_ptr.vmem [resolvable:$true] %s31
      %37 = dma.hbm_to_vmem [thread:$0]  %s1, 2048, %s32, [#allocation6], 128, 128, 8
    $region9: #{tpu_custom_call.1} parent=1 // pred_fallthru
      _
    // Predicated region
    $region10: #{tpu_custom_call.1} parent=1 // pred_check
      _
    $region11: #{tpu_custom_call.1} parent=1 // pred_check_branch
      %39 = sbr.rel (0) target = $region13
    $region12: #{tpu_custom_call.1} parent=1 // pred_region
      _
    $region13: #{tpu_custom_call.1} parent=1 // pred_fallthru
      _
    // Predicated region
    $region14: #{tpu_custom_call.1} parent=1 // pred_check
      _
    $region15: #{tpu_custom_call.1} parent=1 // pred_check_branch
      %41 = sbr.rel (0) target = $region17
    $region16: #{tpu_custom_call.1} parent=1 // pred_region
      %s43 = ssub.s32 2048, 2048
      %44 = vsyncadd [#allocation6], %s43
      %s45 = sshll.u32 [#allocation7], 4
      %s46 = int_to_ptr.vmem [resolvable:$true] %s45
      %51 = dma.hbm_to_vmem [thread:$0]  %s3, 2048, %s46, [#allocation6], 128, 128, 8
    $region17: #{tpu_custom_call.1} parent=1 // pred_fallthru
      _
    // Predicated region
    $region18: #{tpu_custom_call.1} parent=1 // pred_check
      _
    $region19: #{tpu_custom_call.1} parent=1 // pred_check_branch
      %53 = sbr.rel (0) target = $region21
    $region20: #{tpu_custom_call.1} parent=1 // pred_region
      _
    $region21: #{tpu_custom_call.1} parent=1 // pred_fallthru
      _
    // Predicated region
    $region22: #{tpu_custom_call.1} parent=1 // pred_check
      _
    $region23: #{tpu_custom_call.1} parent=1 // pred_check_branch
      %55 = sbr.rel (0) target = $region25
    $region24: #{tpu_custom_call.1} parent=1 // pred_region
      %s57 = ssub.s32 2048, 2048
      %58 = vsyncadd [#allocation9], %s57
      %s59 = sshll.u32 [#allocation8], 4
      %s60 = int_to_ptr.vmem [resolvable:$true] %s59
      %65 = dma.hbm_to_vmem [thread:$0]  %s5, 2048, %s60, [#allocation9], 128, 128, 8
    $region25: #{tpu_custom_call.1} parent=1 // pred_fallthru
      _
    // Predicated region
    $region26: #{tpu_custom_call.1} parent=1 // pred_check
      _
    $region27: #{tpu_custom_call.1} parent=1 // pred_check_branch
      %67 = sbr.rel (0) target = $region29
    $region28: #{tpu_custom_call.1} parent=1 // pred_region
      _
    $region29: #{tpu_custom_call.1} parent=1 // pred_fallthru
      _
    // Predicated region
    $region30: #{tpu_custom_call.1} parent=1 // pred_check
      _
    $region31: #{tpu_custom_call.1} parent=1 // pred_check_branch
      %69 = sbr.rel (0) target = $region33
    $region32: #{tpu_custom_call.1} parent=1 // pred_region
      %70 = dma.done [#allocation3], 128
    $region33: #{tpu_custom_call.1} parent=1 // pred_fallthru
      _
    // Predicated region
    $region34: #{tpu_custom_call.1} parent=1 // pred_check
      _
    $region35: #{tpu_custom_call.1} parent=1 // pred_check_branch
      %72 = sbr.rel (0) target = $region37
    $region36: #{tpu_custom_call.1} parent=1 // pred_region
      %73 = dma.done [#allocation6], 2048
    $region37: #{tpu_custom_call.1} parent=1 // pred_fallthru
      _
    // Predicated region
    $region38: #{tpu_custom_call.1} parent=1 // pred_check
      _
    $region39: #{tpu_custom_call.1} parent=1 // pred_check_branch
      %75 = sbr.rel (0) target = $region41
    $region40: #{tpu_custom_call.1} parent=1 // pred_region
      %76 = dma.done [#allocation6], 2048
    $region41: #{tpu_custom_call.1} parent=1 // pred_fallthru
      _
    // Predicated region
    $region42: #{tpu_custom_call.1} parent=1 // pred_check
      _
    $region43: #{tpu_custom_call.1} parent=1 // pred_check_branch
      %78 = sbr.rel (0) target = $region45
    $region44: #{tpu_custom_call.1} parent=1 // pred_region
      %79 = dma.done [#allocation9], 2048
    $region45: #{tpu_custom_call.1} parent=1 // pred_fallthru
      _
    %v80 = vld [vmem:[#allocation2] sm:$0xff]
    %v81 = vld [vmem:[#allocation5] sm:$0xff]
    %v82 = vld [vmem:[#allocation5 + $0x8] sm:$0xff]
    %v83 = vld [vmem:[#allocation5 + $0x10] sm:$0xff]
    %v84 = vld [vmem:[#allocation5 + $0x18] sm:$0xff]
    %v85 = vld [vmem:[#allocation5 + $0x20] sm:$0xff]
    %v86 = vld [vmem:[#allocation5 + $0x28] sm:$0xff]
    %v87 = vld [vmem:[#allocation5 + $0x30] sm:$0xff]
    %v88 = vld [vmem:[#allocation5 + $0x38] sm:$0xff]
    %v89 = vld [vmem:[#allocation5 + $0x40] sm:$0xff]
    %v90 = vld [vmem:[#allocation5 + $0x48] sm:$0xff]
    %v91 = vld [vmem:[#allocation5 + $0x50] sm:$0xff]
    %v92 = vld [vmem:[#allocation5 + $0x58] sm:$0xff]
    %v93 = vld [vmem:[#allocation5 + $0x60] sm:$0xff]
    %v94 = vld [vmem:[#allocation5 + $0x68] sm:$0xff]
    %v95 = vld [vmem:[#allocation5 + $0x70] sm:$0xff]
    %v96 = vld [vmem:[#allocation5 + $0x78] sm:$0xff]
    %v97 = vld [vmem:[#allocation7] sm:$0xff]
    %v98 = vld [vmem:[#allocation7 + $0x8] sm:$0xff]
    %v99 = vld [vmem:[#allocation7 + $0x10] sm:$0xff]
    %v100 = vld [vmem:[#allocation7 + $0x18] sm:$0xff]
    %v101 = vld [vmem:[#allocation7 + $0x20] sm:$0xff]
    %v102 = vld [vmem:[#allocation7 + $0x28] sm:$0xff]
    %v103 = vld [vmem:[#allocation7 + $0x30] sm:$0xff]
    %v104 = vld [vmem:[#allocation7 + $0x38] sm:$0xff]
    %v105 = vld [vmem:[#allocation7 + $0x40] sm:$0xff]
    %v106 = vld [vmem:[#allocation7 + $0x48] sm:$0xff]
    %v107 = vld [vmem:[#allocation7 + $0x50] sm:$0xff]
    %v108 = vld [vmem:[#allocation7 + $0x58] sm:$0xff]
    %v109 = vld [vmem:[#allocation7 + $0x60] sm:$0xff]
    %v110 = vld [vmem:[#allocation7 + $0x68] sm:$0xff]
    %v111 = vld [vmem:[#allocation7 + $0x70] sm:$0xff]
    %v112 = vld [vmem:[#allocation7 + $0x78] sm:$0xff]
    %v113 = vld [vmem:[#allocation8] sm:$0xff]
    %v114 = vld [vmem:[#allocation8 + $0x8] sm:$0xff]
    %v115 = vld [vmem:[#allocation8 + $0x10] sm:$0xff]
    %v116 = vld [vmem:[#allocation8 + $0x18] sm:$0xff]
    %v117 = vld [vmem:[#allocation8 + $0x20] sm:$0xff]
    %v118 = vld [vmem:[#allocation8 + $0x28] sm:$0xff]
    %v119 = vld [vmem:[#allocation8 + $0x30] sm:$0xff]
    %v120 = vld [vmem:[#allocation8 + $0x38] sm:$0xff]
    %v121 = vld [vmem:[#allocation8 + $0x40] sm:$0xff]
    %v122 = vld [vmem:[#allocation8 + $0x48] sm:$0xff]
    %v123 = vld [vmem:[#allocation8 + $0x50] sm:$0xff]
    %v124 = vld [vmem:[#allocation8 + $0x58] sm:$0xff]
    %v125 = vld [vmem:[#allocation8 + $0x60] sm:$0xff]
    %v126 = vld [vmem:[#allocation8 + $0x68] sm:$0xff]
    %v127 = vld [vmem:[#allocation8 + $0x70] sm:$0xff]
    %v128 = vld [vmem:[#allocation8 + $0x78] sm:$0xff]
    %v129 = vld [vmem:[%s2] sm:$0x1]
    %v131 = vlaneseq
    %v132 = vshrl.u32 %v131, 7
    %v133 = vsub.s32 0, %v132
    %v134 = vrot.slane %v129, %v133
    %136 = vmatprep.subr.mxu0 0.0
    %137 = vmatpush1.msra.mxu0 %v96
    %138 = vmatprep.subr.mxu0 0.0
    %139 = vmatpush1.msra.mxu0 %v95
    %140 = vmatprep.subr.mxu0 0.0
    %141 = vmatpush1.msra.mxu0 %v94
    %142 = vmatprep.subr.mxu0 0.0
    %143 = vmatpush1.msra.mxu0 %v93
    %144 = vmatprep.subr.mxu0 0.0
    %145 = vmatpush1.msra.mxu0 %v92
    %146 = vmatprep.subr.mxu0 0.0
    %147 = vmatpush1.msra.mxu0 %v91
    %148 = vmatprep.subr.mxu0 0.0
    %149 = vmatpush1.msra.mxu0 %v90
    %150 = vmatprep.subr.mxu0 0.0
    %151 = vmatpush1.msra.mxu0 %v89
    %152 = vmatprep.subr.mxu0 0.0
    %153 = vmatpush1.msra.mxu0 %v88
    %154 = vmatprep.subr.mxu0 0.0
    %155 = vmatpush1.msra.mxu0 %v87
    %156 = vmatprep.subr.mxu0 0.0
    %157 = vmatpush1.msra.mxu0 %v86
    %158 = vmatprep.subr.mxu0 0.0
    %159 = vmatpush1.msra.mxu0 %v85
    %160 = vmatprep.subr.mxu0 0.0
    %161 = vmatpush1.msra.mxu0 %v84
    %162 = vmatprep.subr.mxu0 0.0
    %163 = vmatpush1.msra.mxu0 %v83
    %164 = vmatprep.subr.mxu0 0.0
    %165 = vmatpush1.msra.mxu0 %v82
    %166 = vmatprep.subr.mxu0 0.0
    %167 = vmatpush1.msra.mxu0 %v81
    %168 = vmatprep.subr.mxu0 0.0
    %169 = vmatpush2.msra.mxu0 0.0
    %170 = vmatprep.subr.mxu0 0.0
    %171 = vmatpush2.msra.mxu0 0.0
    %172 = vmatprep.subr.mxu0 0.0
    %173 = vmatpush2.msra.mxu0 0.0
    %174 = vmatprep.subr.mxu0 0.0
    %175 = vmatpush2.msra.mxu0 0.0
    %176 = vmatprep.subr.mxu0 0.0
    %177 = vmatpush2.msra.mxu0 0.0
    %178 = vmatprep.subr.mxu0 0.0
    %179 = vmatpush2.msra.mxu0 0.0
    %180 = vmatprep.subr.mxu0 0.0
    %181 = vmatpush2.msra.mxu0 0.0
    %182 = vmatprep.subr.mxu0 0.0
    %183 = vmatpush2.msra.mxu0 0.0
    %184 = vmatprep.subr.mxu0 0.0
    %185 = vmatpush2.msra.mxu0 0.0
    %186 = vmatprep.subr.mxu0 0.0
    %187 = vmatpush2.msra.mxu0 0.0
    %188 = vmatprep.subr.mxu0 0.0
    %189 = vmatpush2.msra.mxu0 0.0
    %190 = vmatprep.subr.mxu0 0.0
    %191 = vmatpush2.msra.mxu0 0.0
    %192 = vmatprep.subr.mxu0 0.0
    %193 = vmatpush2.msra.mxu0 0.0
    %194 = vmatprep.subr.mxu0 0.0
    %195 = vmatpush2.msra.mxu0 0.0
    %196 = vmatprep.subr.mxu0 0.0
    %197 = vmatpush2.msra.mxu0 0.0
    %198 = vmatprep.subr.mxu0 0.0
    %199 = vmatpush2.msra.mxu0 0.0
    %200 = vmatprep.mubr.f32.mxu0 0.0
    %201 = vmatmul.mubr.f32.gmra.mxu0 %v80
    %v202 = vpop.f32.mrf.mxu0
    %v203 = vadd.f32 %v134, %v202
    %v204 = vpop.f32.mrf.mxu0
    %205 = vdwg.mxu0
    %v206 = vmax.f32 %v203, 0.0
    %v207 = vld [vmem:[%s4] sm:$0x1]
    %v209 = vlaneseq
    %v210 = vshrl.u32 %v209, 7
    %v211 = vsub.s32 0, %v210
    %v212 = vrot.slane %v207, %v211
    %214 = vmatprep.subr.mxu0 0.0
    %215 = vmatpush1.msra.mxu0 %v112
    %216 = vmatprep.subr.mxu0 0.0
    %217 = vmatpush1.msra.mxu0 %v111
    %218 = vmatprep.subr.mxu0 0.0
    %219 = vmatpush1.msra.mxu0 %v110
    %220 = vmatprep.subr.mxu0 0.0
    %221 = vmatpush1.msra.mxu0 %v109
    %222 = vmatprep.subr.mxu0 0.0
    %223 = vmatpush1.msra.mxu0 %v108
    %224 = vmatprep.subr.mxu0 0.0
    %225 = vmatpush1.msra.mxu0 %v107
    %226 = vmatprep.subr.mxu0 0.0
    %227 = vmatpush1.msra.mxu0 %v106
    %228 = vmatprep.subr.mxu0 0.0
    %229 = vmatpush1.msra.mxu0 %v105
    %230 = vmatprep.subr.mxu0 0.0
    %231 = vmatpush1.msra.mxu0 %v104
    %232 = vmatprep.subr.mxu0 0.0
    %233 = vmatpush1.msra.mxu0 %v103
    %234 = vmatprep.subr.mxu0 0.0
    %235 = vmatpush1.msra.mxu0 %v102
    %236 = vmatprep.subr.mxu0 0.0
    %237 = vmatpush1.msra.mxu0 %v101
    %238 = vmatprep.subr.mxu0 0.0
    %239 = vmatpush1.msra.mxu0 %v100
    %240 = vmatprep.subr.mxu0 0.0
    %241 = vmatpush1.msra.mxu0 %v99
    %242 = vmatprep.subr.mxu0 0.0
    %243 = vmatpush1.msra.mxu0 %v98
    %244 = vmatprep.subr.mxu0 0.0
    %245 = vmatpush1.msra.mxu0 %v97
    %246 = vmatprep.subr.mxu0 0.0
    %247 = vmatpush2.msra.mxu0 0.0
    %248 = vmatprep.subr.mxu0 0.0
    %249 = vmatpush2.msra.mxu0 0.0
    %250 = vmatprep.subr.mxu0 0.0
    %251 = vmatpush2.msra.mxu0 0.0
    %252 = vmatprep.subr.mxu0 0.0
    %253 = vmatpush2.msra.mxu0 0.0
    %254 = vmatprep.subr.mxu0 0.0
    %255 = vmatpush2.msra.mxu0 0.0
    %256 = vmatprep.subr.mxu0 0.0
    %257 = vmatpush2.msra.mxu0 0.0
    %258 = vmatprep.subr.mxu0 0.0
    %259 = vmatpush2.msra.mxu0 0.0
    %260 = vmatprep.subr.mxu0 0.0
    %261 = vmatpush2.msra.mxu0 0.0
    %262 = vmatprep.subr.mxu0 0.0
    %263 = vmatpush2.msra.mxu0 0.0
    %264 = vmatprep.subr.mxu0 0.0
    %265 = vmatpush2.msra.mxu0 0.0
    %266 = vmatprep.subr.mxu0 0.0
    %267 = vmatpush2.msra.mxu0 0.0
    %268 = vmatprep.subr.mxu0 0.0
    %269 = vmatpush2.msra.mxu0 0.0
    %270 = vmatprep.subr.mxu0 0.0
    %271 = vmatpush2.msra.mxu0 0.0
    %272 = vmatprep.subr.mxu0 0.0
    %273 = vmatpush2.msra.mxu0 0.0
    %274 = vmatprep.subr.mxu0 0.0
    %275 = vmatpush2.msra.mxu0 0.0
    %276 = vmatprep.subr.mxu0 0.0
    %277 = vmatpush2.msra.mxu0 0.0
    %278 = vmatprep.mubr.f32.mxu0 0.0
    %279 = vmatmul.mubr.f32.gmra.mxu0 %v206
    %v280 = vpop.f32.mrf.mxu0
    %v281 = vadd.f32 %v212, %v280
    %v282 = vpop.f32.mrf.mxu0
    %283 = vdwg.mxu0
    %v284 = vmax.f32 %v281, 0.0
    %v285 = vld [vmem:[%s6] sm:$0x1]
    %v287 = vlaneseq
    %v288 = vshrl.u32 %v287, 7
    %v289 = vsub.s32 0, %v288
    %v290 = vrot.slane %v285, %v289
    %292 = vmatprep.subr.mxu0 0.0
    %293 = vmatpush1.msra.mxu0 %v128
    %294 = vmatprep.subr.mxu0 0.0
    %295 = vmatpush1.msra.mxu0 %v127
    %296 = vmatprep.subr.mxu0 0.0
    %297 = vmatpush1.msra.mxu0 %v126
    %298 = vmatprep.subr.mxu0 0.0
    %299 = vmatpush1.msra.mxu0 %v125
    %300 = vmatprep.subr.mxu0 0.0
    %301 = vmatpush1.msra.mxu0 %v124
    %302 = vmatprep.subr.mxu0 0.0
    %303 = vmatpush1.msra.mxu0 %v123
    %304 = vmatprep.subr.mxu0 0.0
    %305 = vmatpush1.msra.mxu0 %v122
    %306 = vmatprep.subr.mxu0 0.0
    %307 = vmatpush1.msra.mxu0 %v121
    %308 = vmatprep.subr.mxu0 0.0
    %309 = vmatpush1.msra.mxu0 %v120
    %310 = vmatprep.subr.mxu0 0.0
    %311 = vmatpush1.msra.mxu0 %v119
    %312 = vmatprep.subr.mxu0 0.0
    %313 = vmatpush1.msra.mxu0 %v118
    %314 = vmatprep.subr.mxu0 0.0
    %315 = vmatpush1.msra.mxu0 %v117
    %316 = vmatprep.subr.mxu0 0.0
    %317 = vmatpush1.msra.mxu0 %v116
    %318 = vmatprep.subr.mxu0 0.0
    %319 = vmatpush1.msra.mxu0 %v115
    %320 = vmatprep.subr.mxu0 0.0
    %321 = vmatpush1.msra.mxu0 %v114
    %322 = vmatprep.subr.mxu0 0.0
    %323 = vmatpush1.msra.mxu0 %v113
    %324 = vmatprep.subr.mxu0 0.0
    %325 = vmatpush2.msra.mxu0 0.0
    %326 = vmatprep.subr.mxu0 0.0
    %327 = vmatpush2.msra.mxu0 0.0
    %328 = vmatprep.subr.mxu0 0.0
    %329 = vmatpush2.msra.mxu0 0.0
    %330 = vmatprep.subr.mxu0 0.0
    %331 = vmatpush2.msra.mxu0 0.0
    %332 = vmatprep.subr.mxu0 0.0
    %333 = vmatpush2.msra.mxu0 0.0
    %334 = vmatprep.subr.mxu0 0.0
    %335 = vmatpush2.msra.mxu0 0.0
    %336 = vmatprep.subr.mxu0 0.0
    %337 = vmatpush2.msra.mxu0 0.0
    %338 = vmatprep.subr.mxu0 0.0
    %339 = vmatpush2.msra.mxu0 0.0
    %340 = vmatprep.subr.mxu0 0.0
    %341 = vmatpush2.msra.mxu0 0.0
    %342 = vmatprep.subr.mxu0 0.0
    %343 = vmatpush2.msra.mxu0 0.0
    %344 = vmatprep.subr.mxu0 0.0
    %345 = vmatpush2.msra.mxu0 0.0
    %346 = vmatprep.subr.mxu0 0.0
    %347 = vmatpush2.msra.mxu0 0.0
    %348 = vmatprep.subr.mxu0 0.0
    %349 = vmatpush2.msra.mxu0 0.0
    %350 = vmatprep.subr.mxu0 0.0
    %351 = vmatpush2.msra.mxu0 0.0
    %352 = vmatprep.subr.mxu0 0.0
    %353 = vmatpush2.msra.mxu0 0.0
    %354 = vmatprep.subr.mxu0 0.0
    %355 = vmatpush2.msra.mxu0 0.0
    %356 = vmatprep.mubr.f32.mxu0 0.0
    %357 = vmatmul.mubr.f32.gmra.mxu0 %v284
    %v358 = vpop.f32.mrf.mxu0
    %v359 = vadd.f32 %v290, %v358
    %v360 = vpop.f32.mrf.mxu0
    %361 = vdwg.mxu0
    %362 = vst [vmem:[#allocation10] sm:$0xff] %v359
    // Predicated region
    $region46: #{tpu_custom_call.1} parent=1 // pred_check
      _
    $region47: #{tpu_custom_call.1} parent=1 // pred_check_branch
      %364 = sbr.rel (0) target = $region49
    $region48: #{tpu_custom_call.1} parent=1 // pred_region
      %s366 = ssub.s32 128, 128
      %367 = vsyncadd [#allocation4], %s366
      %s369 = sshll.u32 [#allocation10], 4
      %s370 = int_to_ptr.vmem [resolvable:$true] %s369
      %372 = dma.vmem_to_hbm [thread:$0]  %s370, 128, %s7, [#allocation4]
    $region49: #{tpu_custom_call.1} parent=1 // pred_fallthru
      _
    // Predicated region
    $region50: #{tpu_custom_call.1} parent=1 // pred_check
      _
    $region51: #{tpu_custom_call.1} parent=1 // pred_check_branch
      %374 = sbr.rel (0) target = $region53
    $region52: #{tpu_custom_call.1} parent=1 // pred_region
      %375 = dma.done [#allocation4], 128
    $region53: #{tpu_custom_call.1} parent=1 // pred_fallthru
      _
    %376 = vsyncpa [#allocation3], 1
    %377 = vsyncpa [#allocation6], 1
    %378 = vsyncpa [#allocation9], 1
    %379 = vsyncpa [#allocation4], 1

</llo_original>
